<compile_context>
chip_gen: v6e
topology: v6e:2x2x1
jax: 0.10.0
libtpu: 0.0.40
codegen_flags: <defaults>
</compile_context>

<pallas_src>
import functools

import jax
import jax.numpy as jnp
from jax import lax
from jax.experimental import pallas as pl
from jax.experimental.pallas import tpu as pltpu


_POOL_CHUNK = 16  # bf16 sublane pack size; pooling reduce chunk


def _round_up(x, m):
    return ((x + m - 1) // m) * m


# ----------------------------------------------------------------------------
# Fused head kernel: AdaptiveAvgPool2d(1) + Linear + BatchNorm1d + ReLU +
#                    (Dropout=identity) + Linear
# ----------------------------------------------------------------------------
def head_kernel(f_ref, w1_ref, t1_ref, w2_ref, b2_ref, o_ref, acc_ref, *, inv_hw):
    # f_ref : [TILE_B, TILE_S, FEAT_LANE] bf16  lane-dense folded feature tile
    # w1_ref: [FEAT_LANE, HID]            bf16  Linear1 weight (BN scale folded,
    #                                           replicated along folded K)
    # t1_ref: [1, HID]                    f32   folded Linear1-bias + BN shift
    # w2_ref: [HID, NCLS_PAD]             bf16  Linear2 weight (transposed, padded)
    # b2_ref: [1, NCLS_PAD]               f32   Linear2 bias (padded)
    # o_ref : [TILE_B, NCLS_PAD]          f32   logits (lane-dense, padded)
    # acc_ref: VMEM [TILE_B, FEAT_LANE]   f32   running spatial sum (the pool)
    s = pl.program_id(1)

    @pl.when(s == 0)
    def _():
        acc_ref[...] = jnp.zeros_like(acc_ref)

    # Pool: chunked spatial-sum accumulate.  Only a 16-row sublane chunk is
    # ever live in f32, so the reduce stays a few vregs (no full-tile upcast).
    tile_s = f_ref.shape[1]
    n_chunks = tile_s // _POOL_CHUNK

    def body(c, carry):
        off = pl.multiple_of(c * _POOL_CHUNK, _POOL_CHUNK)
        blk = f_ref[:, pl.ds(off, _POOL_CHUNK), :].astype(jnp.float32)
        return carry + jnp.sum(blk, axis=1)

    part = lax.fori_loop(0, n_chunks, body,
                         jnp.zeros(acc_ref.shape, jnp.float32),
                         unroll=(n_chunks <= 16))
    acc_ref[...] += part

    @pl.when(s == pl.num_programs(1) - 1)
    def _():
        # Mean folded into one scale (1 / true_HW), then the classifier head.
        pooled = (acc_ref[...] * inv_hw).astype(jnp.bfloat16)
        h = jnp.dot(pooled, w1_ref[...], preferred_element_type=jnp.float32)
        h = jnp.maximum(h + t1_ref[...], 0.0)      # Linear1 bias + BN(eval) + ReLU
        logits = jnp.dot(h.astype(jnp.bfloat16), w2_ref[...],
                         preferred_element_type=jnp.float32)
        o_ref[...] = logits + b2_ref[...]


def fused_head_pallas(f, w1, t1, w2, b2, *, hw_true, tile_b, tile_s):
    """f: [B, HW_fold, FEAT_LANE] bf16 (no padding). Returns [B, NCLS_PAD] f32."""
    b, hw_fold, feat_lane = f.shape
    hid = w1.shape[1]
    ncls_pad = w2.shape[1]
    nb = b // tile_b
    ns = hw_fold // tile_s

    kernel = functools.partial(head_kernel, inv_hw=1.0 / float(hw_true))
    const = pl.Buffered(1)  # single-buffer loop-invariant operands (save VMEM)

    return pl.pallas_call(
        kernel,
        out_shape=jax.ShapeDtypeStruct((b, ncls_pad), jnp.float32),
        grid_spec=pltpu.PrefetchScalarGridSpec(
            num_scalar_prefetch=0,
            grid=(nb, ns),
            in_specs=[
                pl.BlockSpec((tile_b, tile_s, feat_lane), lambda i, s: (i, s, 0)),
                pl.BlockSpec((feat_lane, hid), lambda i, s: (0, 0),
                             pipeline_mode=const),
                pl.BlockSpec((1, hid), lambda i, s: (0, 0), pipeline_mode=const),
                pl.BlockSpec((hid, ncls_pad), lambda i, s: (0, 0),
                             pipeline_mode=const),
                pl.BlockSpec((1, ncls_pad), lambda i, s: (0, 0),
                             pipeline_mode=const),
            ],
            out_specs=pl.BlockSpec((tile_b, ncls_pad), lambda i, s: (i, 0)),
            scratch_shapes=[pltpu.VMEM((tile_b, feat_lane), jnp.float32)],
        ),
        compiler_params=pltpu.CompilerParams(
            dimension_semantics=("parallel", "arbitrary"),
            # v7x: 64 MiB physical VMEM per TC -> keep (double-buffered f block
            # + single-buffered weights + acc) well under ~48 MiB.  v5e/v6e have
            # 128 MiB physical and could take ~2x larger tiles.
            vmem_limit_bytes=64 * 1024 * 1024,
        ),
    )(f, w1, t1, w2, b2)


def _default_tile_s(hw_fold, tile_b, feat_lane):
    """Whole folded spatial extent if it fits ~8 MiB/buffer, else a 16-multiple
    divisor that does (keeps double-buffering alive under v7x's 64 MiB VMEM)."""
    budget = 8 * 1024 * 1024
    cap = budget // (tile_b * feat_lane * 2)             # bf16 bytes per row
    cap = max(_POOL_CHUNK, (cap // _POOL_CHUNK) * _POOL_CHUNK)
    if hw_fold <= cap:
        return hw_fold
    ts = cap
    while ts > _POOL_CHUNK and hw_fold % ts != 0:
        ts -= _POOL_CHUNK
    return ts


# ----------------------------------------------------------------------------
# Full forward
# ----------------------------------------------------------------------------
def birdclef_forward(x, params, *, tile_s=None):
    """x: [B, C_in, H, W] (NCHW, like PyTorch). Returns logits [B, num_classes]."""
    bsz = x.shape[0]
    eps = 1e-5  # PyTorch BatchNorm1d default

    # --- backbone stand-in (XLA; see TODO at top) --------------------------
    # NHWC output so the lane-dense fold below is a free, contiguous reshape.
    feat = lax.conv_general_dilated(
        x, params["conv_w"], window_strides=(1, 1), padding=((1, 1), (1, 1)),
        dimension_numbers=("NCHW", "OIHW", "NHWC"))
    # bias + ReLU + bf16 cast fuse into the conv epilogue -> no extra HBM pass.
    feat = jnp.maximum(feat + params["conv_b"][None, None, None, :], 0.0)
    feat = feat.astype(jnp.bfloat16)
    _, h_out, w_out, cf = feat.shape
    hw = h_out * w_out

    # --- lane-dense fold: [B, HW, cf] -> [B, HW/fold, fold*cf] (exact) ------
    if cf % 128 == 0:
        fold = 1                       # real backbones (1280/2048 ch) land here
    else:
        assert 128 % cf == 0, "TODO(synk): pad channels when cf doesn't divide 128"
        fold = 128 // cf
    assert hw % fold == 0, "TODO(synk): ragged spatial extent vs fold factor"
    feat_lane = cf * fold
    hw_fold = hw // fold
    f = feat.reshape(bsz, hw_fold, feat_lane)   # contiguous -> free reshape

    hid = params["w1"].shape[0]                 # 512
    ncls = params["w2"].shape[0]
    ncls_pad = _round_up(ncls, 128)

    # --- one-time weight prep (tiny): fold BN scale into w1, replicate K ----
    bn_scale = params["bn_gamma"] / jnp.sqrt(params["bn_var"] + eps)
    w1_t = params["w1"].T * bn_scale[None, :]                    # [cf, hid] f32
    w1_f = jnp.tile(w1_t, (fold, 1)).astype(jnp.bfloat16)        # [feat_lane, hid]
    t1 = ((params["b1"] - params["bn_mean"]) * bn_scale
          + params["bn_beta"]).reshape(1, hid).astype(jnp.float32)
    w2_t = jnp.pad(params["w2"].T,
                   ((0, 0), (0, ncls_pad - ncls))).astype(jnp.bfloat16)
    b2 = jnp.pad(params["b2"],
                 (0, ncls_pad - ncls)).reshape(1, ncls_pad).astype(jnp.float32)

    # --- tile selection ------------------------------------------------------
    # tile_b: whole (small) batch here.  For real batch sizes raise toward
    # 32-128 (multiple of 8) under the VMEM budget and keep nb >= 2 on v7x so
    # both TensorCores get work on the "parallel" axis.
    tile_b = bsz if bsz <= 64 else 64
    assert bsz % tile_b == 0, "TODO(synk): pad batch for non-divisible sizes"
    if tile_s is None:
        tile_s = _default_tile_s(hw_fold, tile_b, feat_lane)
    assert tile_s % _POOL_CHUNK == 0, "tile_s must be a multiple of 16"
    assert hw_fold % tile_s == 0, "TODO(synk): mask the ragged last spatial tile"

    logits_pad = fused_head_pallas(f, w1_f, t1, w2_t, b2,
                                   hw_true=hw, tile_b=tile_b, tile_s=tile_s)
    return logits_pad[:, :ncls]


# ----------------------------------------------------------------------------
# Pure-JAX f32 reference (same math, no Pallas) for a sanity check.
# ----------------------------------------------------------------------------
def reference_forward(x, params):
    eps = 1e-5
    y = lax.conv_general_dilated(
        x, params["conv_w"], window_strides=(1, 1), padding=((1, 1), (1, 1)),
        dimension_numbers=("NCHW", "OIHW", "NCHW"))
    y = jnp.maximum(y + params["conv_b"][None, :, None, None], 0.0)
    pooled = jnp.mean(y, axis=(2, 3))                       # [B, feat_dim]
    h = pooled @ params["w1"].T + params["b1"]
    h = (h - params["bn_mean"]) / jnp.sqrt(params["bn_var"] + eps)
    h = h * params["bn_gamma"] + params["bn_beta"]
    h = jnp.maximum(h, 0.0)
    return h @ params["w2"].T + params["b2"]


if __name__ == "__main__":
    key = jax.random.PRNGKey(0)
    ks = jax.random.split(key, 11)

    B, C_in, H, W = 2, 4, 16, 16
    feat_dim, hidden, num_classes = 32, 512, 10

    x = jax.random.normal(ks[0], (B, C_in, H, W), dtype=jnp.float32)
    params = {
        "conv_w": 0.1 * jax.random.normal(ks[1], (feat_dim, C_in, 3, 3), jnp.float32),
        "conv_b": 0.1 * jax.random.normal(ks[2], (feat_dim,), jnp.float32),
        "w1": 0.1 * jax.random.normal(ks[3], (hidden, feat_dim), jnp.float32),
        "b1": 0.1 * jax.random.normal(ks[4], (hidden,), jnp.float32),
        "bn_gamma": 1.0 + 0.1 * jax.random.normal(ks[5], (hidden,), jnp.float32),
        "bn_beta": 0.1 * jax.random.normal(ks[6], (hidden,), jnp.float32),
        "bn_mean": 0.1 * jax.random.normal(ks[7], (hidden,), jnp.float32),
        "bn_var": jax.random.uniform(ks[8], (hidden,), jnp.float32, 0.5, 1.5),
        "w2": 0.1 * jax.random.normal(ks[9], (num_classes, hidden), jnp.float32),
        "b2": 0.1 * jax.random.normal(ks[10], (num_classes,), jnp.float32),
    }

    fwd = jax.jit(birdclef_forward, static_argnames=("tile_s",))
    ref = reference_forward(x, params)

    # Default policy: whole folded spatial extent (hw_fold=64) in one tile, ns=1.
    logits = jax.block_until_ready(fwd(x, params, tile_s=None))
    assert logits.shape == (B, num_classes)
    assert jnp.allclose(logits, ref, atol=5e-2, rtol=5e-2), \
        f"mismatch (ns=1): max abs err {jnp.max(jnp.abs(logits - ref))}"

    # Smaller spatial tile -> exercises the multi-step pl.when accumulator path
    # (init / chunked accumulate / classifier epilogue), ns = 4.
    logits2 = jax.block_until_ready(fwd(x, params, tile_s=16))
    assert jnp.allclose(logits2, ref, atol=5e-2, rtol=5e-2), \
        f"mismatch (ns=4): max abs err {jnp.max(jnp.abs(logits2 - ref))}"

    print("KERNEL_OK")
</pallas_src>

<mosaic_0001>
module attributes {stable_mosaic.version = 11 : i64} {
  func.func @head_kernel(%arg0: i32, %arg1: i32, %arg2: memref<2x64x128xbf16, #tpu.memory_space<vmem>>, %arg3: memref<128x512xbf16, #tpu.memory_space<vmem>>, %arg4: memref<1x512xf32, #tpu.memory_space<vmem>>, %arg5: memref<512x128xbf16, #tpu.memory_space<vmem>>, %arg6: memref<1x128xf32, #tpu.memory_space<vmem>>, %arg7: memref<2x128xf32, #tpu.memory_space<vmem>>, %arg8: memref<2x128xf32, #tpu.memory_space<vmem>>) attributes {dimension_semantics = [#tpu.dimension_semantics<parallel>, #tpu.dimension_semantics<arbitrary>], iteration_bounds = array<i64: 1, 1>, scalar_prefetch = 0 : i64, scratch_operands = 1 : i64, tpu.core_type = #tpu.core_type<tc>, window_params = [{transform_indices = @transform_0, window_bounds = array<i64: 2, 64, 128>}, {pipeline_mode = #tpu.pipeline_mode<synchronous>, transform_indices = @transform_1, window_bounds = array<i64: 128, 512>}, {pipeline_mode = #tpu.pipeline_mode<synchronous>, transform_indices = @transform_2, window_bounds = array<i64: 1, 512>}, {pipeline_mode = #tpu.pipeline_mode<synchronous>, transform_indices = @transform_3, window_bounds = array<i64: 512, 128>}, {pipeline_mode = #tpu.pipeline_mode<synchronous>, transform_indices = @transform_4, window_bounds = array<i64: 1, 128>}, {transform_indices = @transform_5, window_bounds = array<i64: 2, 128>}]} {
    %c0_i32 = arith.constant 0 : i32
    %0 = arith.cmpi eq, %arg1, %c0_i32 : i32
    %1 = arith.extui %0 : i1 to i32
    %c0_i32_0 = arith.constant 0 : i32
    %2 = arith.cmpi ne, %1, %c0_i32_0 : i32
    scf.if %2 {
      %cst_22 = arith.constant 0.000000e+00 : f32
      %38 = vector.broadcast %cst_22 : f32 to vector<2x128xf32>
      %c0_23 = arith.constant 0 : index
      %c0_24 = arith.constant 0 : index
      %39 = vector.load %arg8[%c0_23, %c0_24] : memref<2x128xf32, #tpu.memory_space<vmem>>, vector<2x128xf32>
      tpu.vector_store %arg8[%c0_23, %c0_24], %38 {strides = array<i32>} : memref<2x128xf32, #tpu.memory_space<vmem>>, vector<2x128xf32>,
    } else {
    }
    %cst = arith.constant 0.000000e+00 : f32
    %3 = vector.broadcast %cst : f32 to vector<2x128xf32>
    %c0_i32_1 = arith.constant 0 : i32
    %c16_i32 = arith.constant 16 : i32
    %4 = arith.muli %c0_i32_1, %c16_i32 : i32
    %5 = tpu.assume_multiple %4, 16 : i32
    %c0 = arith.constant 0 : index
    %6 = arith.index_cast %5 : i32 to index
    %c0_2 = arith.constant 0 : index
    %7 = vector.load %arg2[%c0, %6, %c0_2] : memref<2x64x128xbf16, #tpu.memory_space<vmem>>, vector<2x16x128xbf16>
    %8 = arith.extf %7 : vector<2x16x128xbf16> to vector<2x16x128xf32>
    %cst_3 = arith.constant dense<0.000000e+00> : vector<2x128xf32>
    %9 = vector.multi_reduction <add>, %8, %cst_3 [1] : vector<2x16x128xf32> to vector<2x128xf32>
    %10 = arith.addf %3, %9 : vector<2x128xf32>
    %c1_i32 = arith.constant 1 : i32
    %c16_i32_4 = arith.constant 16 : i32
    %11 = arith.muli %c1_i32, %c16_i32_4 : i32
    %12 = tpu.assume_multiple %11, 16 : i32
    %c0_5 = arith.constant 0 : index
    %13 = arith.index_cast %12 : i32 to index
    %c0_6 = arith.constant 0 : index
    %14 = vector.load %arg2[%c0_5, %13, %c0_6] : memref<2x64x128xbf16, #tpu.memory_space<vmem>>, vector<2x16x128xbf16>
    %15 = arith.extf %14 : vector<2x16x128xbf16> to vector<2x16x128xf32>
    %cst_7 = arith.constant dense<0.000000e+00> : vector<2x128xf32>
    %16 = vector.multi_reduction <add>, %15, %cst_7 [1] : vector<2x16x128xf32> to vector<2x128xf32>
    %17 = arith.addf %10, %16 : vector<2x128xf32>
    %c2_i32 = arith.constant 2 : i32
    %c16_i32_8 = arith.constant 16 : i32
    %18 = arith.muli %c2_i32, %c16_i32_8 : i32
    %19 = tpu.assume_multiple %18, 16 : i32
    %c0_9 = arith.constant 0 : index
    %20 = arith.index_cast %19 : i32 to index
    %c0_10 = arith.constant 0 : index
    %21 = vector.load %arg2[%c0_9, %20, %c0_10] : memref<2x64x128xbf16, #tpu.memory_space<vmem>>, vector<2x16x128xbf16>
    %22 = arith.extf %21 : vector<2x16x128xbf16> to vector<2x16x128xf32>
    %cst_11 = arith.constant dense<0.000000e+00> : vector<2x128xf32>
    %23 = vector.multi_reduction <add>, %22, %cst_11 [1] : vector<2x16x128xf32> to vector<2x128xf32>
    %24 = arith.addf %17, %23 : vector<2x128xf32>
    %c3_i32 = arith.constant 3 : i32
    %c16_i32_12 = arith.constant 16 : i32
    %25 = arith.muli %c3_i32, %c16_i32_12 : i32
    %26 = tpu.assume_multiple %25, 16 : i32
    %c0_13 = arith.constant 0 : index
    %27 = arith.index_cast %26 : i32 to index
    %c0_14 = arith.constant 0 : index
    %28 = vector.load %arg2[%c0_13, %27, %c0_14] : memref<2x64x128xbf16, #tpu.memory_space<vmem>>, vector<2x16x128xbf16>
    %29 = arith.extf %28 : vector<2x16x128xbf16> to vector<2x16x128xf32>
    %cst_15 = arith.constant dense<0.000000e+00> : vector<2x128xf32>
    %30 = vector.multi_reduction <add>, %29, %cst_15 [1] : vector<2x16x128xf32> to vector<2x128xf32>
    %31 = arith.addf %24, %30 : vector<2x128xf32>
    %c4_i32 = arith.constant 4 : i32
    %c0_16 = arith.constant 0 : index
    %c0_17 = arith.constant 0 : index
    %32 = vector.load %arg8[%c0_16, %c0_17] : memref<2x128xf32, #tpu.memory_space<vmem>>, vector<2x128xf32>
    %33 = arith.addf %32, %31 : vector<2x128xf32>
    %c0_18 = arith.constant 0 : index
    %c0_19 = arith.constant 0 : index
    %34 = vector.load %arg8[%c0_18, %c0_19] : memref<2x128xf32, #tpu.memory_space<vmem>>, vector<2x128xf32>
    tpu.vector_store %arg8[%c0_18, %c0_19], %33 {strides = array<i32>} : memref<2x128xf32, #tpu.memory_space<vmem>>, vector<2x128xf32>,
    %c0_i32_20 = arith.constant 0 : i32
    %35 = arith.cmpi eq, %arg1, %c0_i32_20 : i32
    %36 = arith.extui %35 : i1 to i32
    %c0_i32_21 = arith.constant 0 : i32
    %37 = arith.cmpi ne, %36, %c0_i32_21 : i32
    scf.if %37 {
      %c0_22 = arith.constant 0 : index
      %c0_23 = arith.constant 0 : index
      %38 = vector.load %arg8[%c0_22, %c0_23] : memref<2x128xf32, #tpu.memory_space<vmem>>, vector<2x128xf32>
      %cst_24 = arith.constant 3.906250e-03 : f32
      %39 = vector.broadcast %cst_24 : f32 to vector<2x128xf32>
      %40 = arith.mulf %38, %39 : vector<2x128xf32>
      %41 = arith.truncf %40 : vector<2x128xf32> to vector<2x128xbf16>
      %c0_25 = arith.constant 0 : index
      %c0_26 = arith.constant 0 : index
      %42 = vector.load %arg3[%c0_25, %c0_26] : memref<128x512xbf16, #tpu.memory_space<vmem>>, vector<128x512xbf16>
      %cst_27 = arith.constant dense<0.000000e+00> : vector<2x512xf32>
      %43 = tpu.matmul %41, %42, %cst_27 {dimension_numbers = #tpu.dot_dimension_numbers<[1], [0], [0], [1], [0, 0, 1, 1], [], []>} : vector<2x128xbf16>, vector<128x512xbf16>, vector<2x512xf32> -> vector<2x512xf32>
      %c0_28 = arith.constant 0 : index
      %c0_29 = arith.constant 0 : index
      %44 = vector.load %arg4[%c0_28, %c0_29] : memref<1x512xf32, #tpu.memory_space<vmem>>, vector<1x512xf32>
      %45 = vector.broadcast %44 : vector<1x512xf32> to vector<2x512xf32>
      %46 = arith.addf %43, %45 : vector<2x512xf32>
      %cst_30 = arith.constant 0.000000e+00 : f32
      %47 = vector.broadcast %cst_30 : f32 to vector<2x512xf32>
      %48 = arith.maximumf %46, %47 : vector<2x512xf32>
      %49 = arith.truncf %48 : vector<2x512xf32> to vector<2x512xbf16>
      %c0_31 = arith.constant 0 : index
      %c0_32 = arith.constant 0 : index
      %50 = vector.load %arg5[%c0_31, %c0_32] : memref<512x128xbf16, #tpu.memory_space<vmem>>, vector<512x128xbf16>
      %cst_33 = arith.constant dense<0.000000e+00> : vector<2x128xf32>
      %51 = tpu.matmul %49, %50, %cst_33 {dimension_numbers = #tpu.dot_dimension_numbers<[1], [0], [0], [1], [0, 0, 1, 1], [], []>} : vector<2x512xbf16>, vector<512x128xbf16>, vector<2x128xf32> -> vector<2x128xf32>
      %c0_34 = arith.constant 0 : index
      %c0_35 = arith.constant 0 : index
      %52 = vector.load %arg6[%c0_34, %c0_35] : memref<1x128xf32, #tpu.memory_space<vmem>>, vector<1x128xf32>
      %53 = vector.broadcast %52 : vector<1x128xf32> to vector<2x128xf32>
      %54 = arith.addf %51, %53 : vector<2x128xf32>
      %c0_36 = arith.constant 0 : index
      %c0_37 = arith.constant 0 : index
      %55 = vector.load %arg7[%c0_36, %c0_37] : memref<2x128xf32, #tpu.memory_space<vmem>>, vector<2x128xf32>
      tpu.vector_store %arg7[%c0_36, %c0_37], %54 {strides = array<i32>} : memref<2x128xf32, #tpu.memory_space<vmem>>, vector<2x128xf32>,
    } else {
    }
    return
  }
  func.func @transform_0(%arg0: i32, %arg1: i32) -> (i32, i32, i32) {
    %c0_i32 = arith.constant 0 : i32
    %c0_i32_0 = arith.constant 0 : i32
    return %arg0, %arg1, %c0_i32 : i32, i32, i32
  }
  func.func @transform_1(%arg0: i32, %arg1: i32) -> (i32, i32) {
    %c0_i32 = arith.constant 0 : i32
    %c0_i32_0 = arith.constant 0 : i32
    %c0_i32_1 = arith.constant 0 : i32
    return %c0_i32, %c0_i32_0 : i32, i32
  }
  func.func @transform_2(%arg0: i32, %arg1: i32) -> (i32, i32) {
    %c0_i32 = arith.constant 0 : i32
    %c0_i32_0 = arith.constant 0 : i32
    %c0_i32_1 = arith.constant 0 : i32
    return %c0_i32, %c0_i32_0 : i32, i32
  }
  func.func @transform_3(%arg0: i32, %arg1: i32) -> (i32, i32) {
    %c0_i32 = arith.constant 0 : i32
    %c0_i32_0 = arith.constant 0 : i32
    %c0_i32_1 = arith.constant 0 : i32
    return %c0_i32, %c0_i32_0 : i32, i32
  }
  func.func @transform_4(%arg0: i32, %arg1: i32) -> (i32, i32) {
    %c0_i32 = arith.constant 0 : i32
    %c0_i32_0 = arith.constant 0 : i32
    %c0_i32_1 = arith.constant 0 : i32
    return %c0_i32, %c0_i32_0 : i32, i32
  }
  func.func @transform_5(%arg0: i32, %arg1: i32) -> (i32, i32) {
    %c0_i32 = arith.constant 0 : i32
    %c0_i32_0 = arith.constant 0 : i32
    return %arg0, %c0_i32 : i32, i32
  }
}

</mosaic_0001>

<llo_original>
// kernel: birdclef_forward.1
$region0: #{birdclef_forward.1}
  #allocation0 [shape = 'u32[]', space=smem, size = 0x4, offset = 0x4, fixed_abs, tag = 'smem constant byte address 0x4 - core index']
  #allocation1 [shape = 'u32[144,128]{1,0:T(1,128)}', space=vmem, size = 0x12000, scoped, tag = 'internal scratch']
  #allocation2 [shape = 'f32[2,128]{1,0:T(2,128)}', space=vmem, size = 0x400, scoped, tag = 'scratch operand']
  %s0 = inlined_call_operand.vmem [shape: bf16[2,64,128], index: 0, kind: input, shape index: {}]
  %s1 = inlined_call_operand.vmem [shape: bf16[128,512], index: 1, kind: input, shape index: {}]
  %s2 = inlined_call_operand.vmem [shape: f32[1,512], index: 2, kind: input, shape index: {}]
  %s3 = inlined_call_operand.vmem [shape: bf16[512,128], index: 3, kind: input, shape index: {}]
  %s4 = inlined_call_operand.vmem [shape: f32[1,128], index: 4, kind: input, shape index: {}]
  %s5 = inlined_call_operand.hbm [shape: f32[2,128], index: 5, kind: output, shape index: {}]
  %s6 = sld [smem:[#allocation0]]
  $region38: #{birdclef_forward.1} parent=0
    _
  %s8 = ssub.s32 1, %s6
  %s9 = scalar_select 0, %s8, %s6
  $region1: #{birdclef_forward.1} parent=0
    #allocation3 [shape = 'u8[1024]{0}', space=vmem, size = 0x400, scoped, tag = 'output window, operand 0, single buffered']
    #allocation4 [shape = 's32[1]{0}', space=sflag, size = 0x4, scoped, tag = 'scoped memory for birdclef_forward.1']
    %10 = vsyncpa [#allocation4], 0
    // Predicated region
    $region2: #{birdclef_forward.1} parent=1 // pred_check
      _
    $region3: #{birdclef_forward.1} parent=1 // pred_check_branch
      %12 = sbr.rel (0) target = $region5
    $region4: #{birdclef_forward.1} parent=1 // pred_region
      _
    $region5: #{birdclef_forward.1} parent=1 // pred_fallthru
      _
    // Predicated region
    $region6: #{birdclef_forward.1} parent=1 // pred_check
      _
    $region7: #{birdclef_forward.1} parent=1 // pred_check_branch
      %14 = sbr.rel (0) target = $region9
    $region8: #{birdclef_forward.1} parent=1 // pred_region
      _
    $region9: #{birdclef_forward.1} parent=1 // pred_fallthru
      _
    // Predicated region
    $region10: #{birdclef_forward.1} parent=1 // pred_check
      _
    $region11: #{birdclef_forward.1} parent=1 // pred_check_branch
      %16 = sbr.rel (0) target = $region13
    $region12: #{birdclef_forward.1} parent=1 // pred_region
      _
    $region13: #{birdclef_forward.1} parent=1 // pred_fallthru
      _
    // Predicated region
    $region14: #{birdclef_forward.1} parent=1 // pred_check
      _
    $region15: #{birdclef_forward.1} parent=1 // pred_check_branch
      %18 = sbr.rel (0) target = $region17
    $region16: #{birdclef_forward.1} parent=1 // pred_region
      _
    $region17: #{birdclef_forward.1} parent=1 // pred_fallthru
      _
    // Predicated region
    $region18: #{birdclef_forward.1} parent=1 // pred_check
      _
    $region19: #{birdclef_forward.1} parent=1 // pred_check_branch
      %20 = sbr.rel (0) target = $region21
    $region20: #{birdclef_forward.1} parent=1 // pred_region
      _
    $region21: #{birdclef_forward.1} parent=1 // pred_fallthru
      _
    %p22 = scmp.eq.s32.totalorder 0, 0
    // Predicated region
    $region22: #{birdclef_forward.1} parent=1 // pred_check
      %p23 = pneg %p22
    $region23: #{birdclef_forward.1} parent=1 // pred_check_branch
      %25 = sbr.rel (%p23) target = $region25
    $region24: #{birdclef_forward.1} parent=1 // pred_region
      %26 = vst [vmem:[#allocation2] sm:$0x3] 0.0
    $region25: #{birdclef_forward.1} parent=1 // pred_fallthru
      _
    %v27 = vld [vmem:[%s0] sm:$0xf]
    %v28 = vld [vmem:[%s0 + $0x4] sm:$0xf]
    %v29 = vld [vmem:[%s0 + $0x20] sm:$0xf]
    %v30 = vld [vmem:[%s0 + $0x24] sm:$0xf]
    %v31 = vunpack.c.l.bf16 %v27
    %v32 = vunpack.c.l.bf16 %v28
    %v33 = vunpack.c.l.bf16 %v29
    %v34 = vunpack.c.l.bf16 %v30
    %v35 = vadd.f32 %v31, %v32
    %v36 = vrot.slane %v35, 4
    %v37 = vadd.f32 %v35, %v36
    %v38 = vrot.slane %v37, 2
    %v39 = vadd.f32 %v37, %v38
    %v40 = vrot.slane %v39, 1
    %v41 = vadd.f32 %v39, %v40
    %v42 = vadd.f32 %v33, %v34
    %v43 = vrot.slane %v42, 4
    %v44 = vadd.f32 %v42, %v43
    %v45 = vrot.slane %v44, 2
    %v46 = vadd.f32 %v44, %v45
    %v47 = vrot.slane %v46, 1
    %v48 = vadd.f32 %v46, %v47
    %v49 = vadd.f32 %v41, 0.0
    %v50 = vadd.f32 %v48, 0.0
    %s51 = scalar_lea.vmem %s0, 8
    %v52 = vld [vmem:[%s51] sm:$0xf]
    %v53 = vld [vmem:[%s51 + $0x4] sm:$0xf]
    %v54 = vld [vmem:[%s51 + $0x20] sm:$0xf]
    %v55 = vld [vmem:[%s51 + $0x24] sm:$0xf]
    %v56 = vunpack.c.l.bf16 %v52
    %v57 = vunpack.c.l.bf16 %v53
    %v58 = vunpack.c.l.bf16 %v54
    %v59 = vunpack.c.l.bf16 %v55
    %v60 = vadd.f32 %v56, %v57
    %v61 = vrot.slane %v60, 4
    %v62 = vadd.f32 %v60, %v61
    %v63 = vrot.slane %v62, 2
    %v64 = vadd.f32 %v62, %v63
    %v65 = vrot.slane %v64, 1
    %v66 = vadd.f32 %v64, %v65
    %v67 = vadd.f32 %v58, %v59
    %v68 = vrot.slane %v67, 4
    %v69 = vadd.f32 %v67, %v68
    %v70 = vrot.slane %v69, 2
    %v71 = vadd.f32 %v69, %v70
    %v72 = vrot.slane %v71, 1
    %v73 = vadd.f32 %v71, %v72
    %v74 = vadd.f32 %v49, %v66
    %v75 = vadd.f32 %v50, %v73
    %s76 = scalar_lea.vmem %s0, 16
    %v77 = vld [vmem:[%s76] sm:$0xf]
    %v78 = vld [vmem:[%s76 + $0x4] sm:$0xf]
    %v79 = vld [vmem:[%s76 + $0x20] sm:$0xf]
    %v80 = vld [vmem:[%s76 + $0x24] sm:$0xf]
    %v81 = vunpack.c.l.bf16 %v77
    %v82 = vunpack.c.l.bf16 %v78
    %v83 = vunpack.c.l.bf16 %v79
    %v84 = vunpack.c.l.bf16 %v80
    %v85 = vadd.f32 %v81, %v82
    %v86 = vrot.slane %v85, 4
    %v87 = vadd.f32 %v85, %v86
    %v88 = vrot.slane %v87, 2
    %v89 = vadd.f32 %v87, %v88
    %v90 = vrot.slane %v89, 1
    %v91 = vadd.f32 %v89, %v90
    %v92 = vadd.f32 %v83, %v84
    %v93 = vrot.slane %v92, 4
    %v94 = vadd.f32 %v92, %v93
    %v95 = vrot.slane %v94, 2
    %v96 = vadd.f32 %v94, %v95
    %v97 = vrot.slane %v96, 1
    %v98 = vadd.f32 %v96, %v97
    %v99 = vadd.f32 %v74, %v91
    %v100 = vadd.f32 %v75, %v98
    %s101 = scalar_lea.vmem %s0, 24
    %v102 = vld [vmem:[%s101] sm:$0xf]
    %v103 = vld [vmem:[%s101 + $0x4] sm:$0xf]
    %v104 = vld [vmem:[%s101 + $0x20] sm:$0xf]
    %v105 = vld [vmem:[%s101 + $0x24] sm:$0xf]
    %v106 = vunpack.c.l.bf16 %v102
    %v107 = vunpack.c.l.bf16 %v103
    %v108 = vunpack.c.l.bf16 %v104
    %v109 = vunpack.c.l.bf16 %v105
    %v110 = vadd.f32 %v106, %v107
    %v111 = vrot.slane %v110, 4
    %v112 = vadd.f32 %v110, %v111
    %v113 = vrot.slane %v112, 2
    %v114 = vadd.f32 %v112, %v113
    %v115 = vrot.slane %v114, 1
    %v116 = vadd.f32 %v114, %v115
    %v117 = vadd.f32 %v108, %v109
    %v118 = vrot.slane %v117, 4
    %v119 = vadd.f32 %v117, %v118
    %v120 = vrot.slane %v119, 2
    %v121 = vadd.f32 %v119, %v120
    %v122 = vrot.slane %v121, 1
    %v123 = vadd.f32 %v121, %v122
    %v124 = vadd.f32 %v99, %v116
    %v125 = vadd.f32 %v100, %v123
    %v126 = vld [vmem:[#allocation2] sm:$0x3]
    %vm129 = vcmask 1041409
    %v130 = vsel %vm129, %v125, %v124
    %v132 = vadd.f32 %v126, %v130
    %133 = vst [vmem:[#allocation2] sm:$0x3] %v132
    // Predicated region
    $region26: #{birdclef_forward.1} parent=1 // pred_check
      %p134 = pneg %p22
    $region27: #{birdclef_forward.1} parent=1 // pred_check_branch
      %136 = sbr.rel (%p134) target = $region29
    $region28: #{birdclef_forward.1} parent=1 // pred_region
      %v137 = vld [vmem:[#allocation2] sm:$0x3]
      %v138 = vmul.f32 %v137, 0.00390625
      %v139 = vpack.c.bf16 %v138, %v138
      %v140 = vld [vmem:[%s1] sm:$0xff]
      %v141 = vld [vmem:[%s1 + $0x8] sm:$0xff]
      %v142 = vld [vmem:[%s1 + $0x10] sm:$0xff]
      %v143 = vld [vmem:[%s1 + $0x18] sm:$0xff]
      %v144 = vld [vmem:[%s1 + $0x20] sm:$0xff]
      %v145 = vld [vmem:[%s1 + $0x28] sm:$0xff]
      %v146 = vld [vmem:[%s1 + $0x30] sm:$0xff]
      %v147 = vld [vmem:[%s1 + $0x38] sm:$0xff]
      %v148 = vld [vmem:[%s1 + $0x40] sm:$0xff]
      %v149 = vld [vmem:[%s1 + $0x48] sm:$0xff]
      %v150 = vld [vmem:[%s1 + $0x50] sm:$0xff]
      %v151 = vld [vmem:[%s1 + $0x58] sm:$0xff]
      %v152 = vld [vmem:[%s1 + $0x60] sm:$0xff]
      %v153 = vld [vmem:[%s1 + $0x68] sm:$0xff]
      %v154 = vld [vmem:[%s1 + $0x70] sm:$0xff]
      %v155 = vld [vmem:[%s1 + $0x78] sm:$0xff]
      %v156 = vld [vmem:[%s1 + $0x80] sm:$0xff]
      %v157 = vld [vmem:[%s1 + $0x88] sm:$0xff]
      %v158 = vld [vmem:[%s1 + $0x90] sm:$0xff]
      %v159 = vld [vmem:[%s1 + $0x98] sm:$0xff]
      %v160 = vld [vmem:[%s1 + $0xa0] sm:$0xff]
      %v161 = vld [vmem:[%s1 + $0xa8] sm:$0xff]
      %v162 = vld [vmem:[%s1 + $0xb0] sm:$0xff]
      %v163 = vld [vmem:[%s1 + $0xb8] sm:$0xff]
      %v164 = vld [vmem:[%s1 + $0xc0] sm:$0xff]
      %v165 = vld [vmem:[%s1 + $0xc8] sm:$0xff]
      %v166 = vld [vmem:[%s1 + $0xd0] sm:$0xff]
      %v167 = vld [vmem:[%s1 + $0xd8] sm:$0xff]
      %v168 = vld [vmem:[%s1 + $0xe0] sm:$0xff]
      %v169 = vld [vmem:[%s1 + $0xe8] sm:$0xff]
      %v170 = vld [vmem:[%s1 + $0xf0] sm:$0xff]
      %v171 = vld [vmem:[%s1 + $0xf8] sm:$0xff]
      %v172 = vld [vmem:[%s2] sm:$0xf]
      %v174 = vlaneseq
      %v175 = vshrl.u32 %v174, 7
      %v176 = vsub.s32 0, %v175
      %v177 = vrot.slane %v172, %v176
      %v178 = vlaneseq
      %v179 = vshrl.u32 %v178, 7
      %v180 = vsub.s32 1, %v179
      %v181 = vrot.slane %v172, %v180
      %v182 = vlaneseq
      %v183 = vshrl.u32 %v182, 7
      %v184 = vsub.s32 2, %v183
      %v185 = vrot.slane %v172, %v184
      %v186 = vlaneseq
      %v187 = vshrl.u32 %v186, 7
      %v188 = vsub.s32 3, %v187
      %v189 = vrot.slane %v172, %v188
      %v226 = vunpack.c.l.b16 %v140
      %v227 = vunpack.c.h.b16 %v140
      %v228 = vunpack.c.l.b16 %v141
      %v229 = vunpack.c.h.b16 %v141
      %v230 = vunpack.c.l.b16 %v142
      %v231 = vunpack.c.h.b16 %v142
      %v232 = vunpack.c.l.b16 %v143
      %v233 = vunpack.c.h.b16 %v143
      %v234 = vunpack.c.l.b16 %v144
      %v235 = vunpack.c.h.b16 %v144
      %v236 = vunpack.c.l.b16 %v145
      %v237 = vunpack.c.h.b16 %v145
      %v238 = vunpack.c.l.b16 %v146
      %v239 = vunpack.c.h.b16 %v146
      %v240 = vunpack.c.l.b16 %v147
      %v241 = vunpack.c.h.b16 %v147
      %v242 = vunpack.c.l.b16 %v148
      %v243 = vunpack.c.h.b16 %v148
      %v244 = vunpack.c.l.b16 %v149
      %v245 = vunpack.c.h.b16 %v149
      %v246 = vunpack.c.l.b16 %v150
      %v247 = vunpack.c.h.b16 %v150
      %v248 = vunpack.c.l.b16 %v151
      %v249 = vunpack.c.h.b16 %v151
      %v250 = vunpack.c.l.b16 %v152
      %v251 = vunpack.c.h.b16 %v152
      %v252 = vunpack.c.l.b16 %v153
      %v253 = vunpack.c.h.b16 %v153
      %v254 = vunpack.c.l.b16 %v154
      %v255 = vunpack.c.h.b16 %v154
      %v256 = vunpack.c.l.b16 %v155
      %v257 = vunpack.c.h.b16 %v155
      %v258 = vunpack.c.l.b16 %v156
      %v259 = vunpack.c.h.b16 %v156
      %v260 = vunpack.c.l.b16 %v157
      %v261 = vunpack.c.h.b16 %v157
      %v262 = vunpack.c.l.b16 %v158
      %v263 = vunpack.c.h.b16 %v158
      %v264 = vunpack.c.l.b16 %v159
      %v265 = vunpack.c.h.b16 %v159
      %v266 = vunpack.c.l.b16 %v160
      %v267 = vunpack.c.h.b16 %v160
      %v268 = vunpack.c.l.b16 %v161
      %v269 = vunpack.c.h.b16 %v161
      %v270 = vunpack.c.l.b16 %v162
      %v271 = vunpack.c.h.b16 %v162
      %v272 = vunpack.c.l.b16 %v163
      %v273 = vunpack.c.h.b16 %v163
      %v274 = vunpack.c.l.b16 %v164
      %v275 = vunpack.c.h.b16 %v164
      %v276 = vunpack.c.l.b16 %v165
      %v277 = vunpack.c.h.b16 %v165
      %v278 = vunpack.c.l.b16 %v166
      %v279 = vunpack.c.h.b16 %v166
      %v280 = vunpack.c.l.b16 %v167
      %v281 = vunpack.c.h.b16 %v167
      %v282 = vunpack.c.l.b16 %v168
      %v283 = vunpack.c.h.b16 %v168
      %v284 = vunpack.c.l.b16 %v169
      %v285 = vunpack.c.h.b16 %v169
      %v286 = vunpack.c.l.b16 %v170
      %v287 = vunpack.c.h.b16 %v170
      %v288 = vunpack.c.l.b16 %v171
      %v289 = vunpack.c.h.b16 %v171
      %v290 = vpack.c.b16 %v230, %v226
      %v291 = vpack.c.b16 %v231, %v227
      %v292 = vpack.c.b16 %v232, %v228
      %v293 = vpack.c.b16 %v233, %v229
      %v294 = vpack.c.b16 %v238, %v234
      %v295 = vpack.c.b16 %v239, %v235
      %v296 = vpack.c.b16 %v240, %v236
      %v297 = vpack.c.b16 %v241, %v237
      %v298 = vpack.c.b16 %v246, %v242
      %v299 = vpack.c.b16 %v247, %v243
      %v300 = vpack.c.b16 %v248, %v244
      %v301 = vpack.c.b16 %v249, %v245
      %v302 = vpack.c.b16 %v254, %v250
      %v303 = vpack.c.b16 %v255, %v251
      %v304 = vpack.c.b16 %v256, %v252
      %v305 = vpack.c.b16 %v257, %v253
      %v306 = vpack.c.b16 %v262, %v258
      %v307 = vpack.c.b16 %v263, %v259
      %v308 = vpack.c.b16 %v264, %v260
      %v309 = vpack.c.b16 %v265, %v261
      %v310 = vpack.c.b16 %v270, %v266
      %v311 = vpack.c.b16 %v271, %v267
      %v312 = vpack.c.b16 %v272, %v268
      %v313 = vpack.c.b16 %v273, %v269
      %v314 = vpack.c.b16 %v278, %v274
      %v315 = vpack.c.b16 %v279, %v275
      %v316 = vpack.c.b16 %v280, %v276
      %v317 = vpack.c.b16 %v281, %v277
      %v318 = vpack.c.b16 %v286, %v282
      %v319 = vpack.c.b16 %v287, %v283
      %v320 = vpack.c.b16 %v288, %v284
      %v321 = vpack.c.b16 %v289, %v285
      %354 = vmatprep.subr.bf16.mxu0 %v319
      %355 = vmatpush1.bf16.msra.mxu0 %v318
      %356 = vmatprep.subr.bf16.mxu0 %v315
      %357 = vmatpush1.bf16.msra.mxu0 %v314
      %358 = vmatprep.subr.bf16.mxu0 %v311
      %359 = vmatpush1.bf16.msra.mxu0 %v310
      %360 = vmatprep.subr.bf16.mxu0 %v307
      %361 = vmatpush1.bf16.msra.mxu0 %v306
      %362 = vmatprep.subr.bf16.mxu0 %v303
      %363 = vmatpush1.bf16.msra.mxu0 %v302
      %364 = vmatprep.subr.bf16.mxu0 %v299
      %365 = vmatpush1.bf16.msra.mxu0 %v298
      %366 = vmatprep.subr.bf16.mxu0 %v295
      %367 = vmatpush1.bf16.msra.mxu0 %v294
      %368 = vmatprep.subr.bf16.mxu0 %v291
      %369 = vmatpush1.bf16.msra.mxu0 %v290
      %370 = vmatprep.subr.bf16.mxu0 0
      %371 = vmatpush2.bf16.msra.mxu0 0
      %372 = vmatprep.subr.bf16.mxu0 0
      %373 = vmatpush2.bf16.msra.mxu0 0
      %374 = vmatprep.subr.bf16.mxu0 0
      %375 = vmatpush2.bf16.msra.mxu0 0
      %376 = vmatprep.subr.bf16.mxu0 0
      %377 = vmatpush2.bf16.msra.mxu0 0
      %378 = vmatprep.subr.bf16.mxu0 0
      %379 = vmatpush2.bf16.msra.mxu0 0
      %380 = vmatprep.subr.bf16.mxu0 0
      %381 = vmatpush2.bf16.msra.mxu0 0
      %382 = vmatprep.subr.bf16.mxu0 0
      %383 = vmatpush2.bf16.msra.mxu0 0
      %384 = vmatprep.subr.bf16.mxu0 0
      %385 = vmatpush2.bf16.msra.mxu0 0
      %386 = vmatprep.mubr.bf16.mxu0 0
      %387 = vmatmul.mubr.bf16.gmra.mxu0 %v139
      %v388 = vpop.f32.mrf.mxu0
      %v389 = vadd.f32 %v177, %v388
      %v390 = vpop.f32.mrf.mxu0
      %v391 = vadd.f32 %v181, %v390
      %v392 = vpop.f32.mrf.mxu0
      %v393 = vpop.f32.mrf.mxu0
      %394 = vdwg.mxu0
      %395 = vmatprep.subr.bf16.mxu0 %v321
      %396 = vmatpush1.bf16.msra.mxu0 %v320
      %397 = vmatprep.subr.bf16.mxu0 %v317
      %398 = vmatpush1.bf16.msra.mxu0 %v316
      %399 = vmatprep.subr.bf16.mxu0 %v313
      %400 = vmatpush1.bf16.msra.mxu0 %v312
      %401 = vmatprep.subr.bf16.mxu0 %v309
      %402 = vmatpush1.bf16.msra.mxu0 %v308
      %403 = vmatprep.subr.bf16.mxu0 %v305
      %404 = vmatpush1.bf16.msra.mxu0 %v304
      %405 = vmatprep.subr.bf16.mxu0 %v301
      %406 = vmatpush1.bf16.msra.mxu0 %v300
      %407 = vmatprep.subr.bf16.mxu0 %v297
      %408 = vmatpush1.bf16.msra.mxu0 %v296
      %409 = vmatprep.subr.bf16.mxu0 %v293
      %410 = vmatpush1.bf16.msra.mxu0 %v292
      %411 = vmatprep.subr.bf16.mxu0 0
      %412 = vmatpush2.bf16.msra.mxu0 0
      %413 = vmatprep.subr.bf16.mxu0 0
      %414 = vmatpush2.bf16.msra.mxu0 0
      %415 = vmatprep.subr.bf16.mxu0 0
      %416 = vmatpush2.bf16.msra.mxu0 0
      %417 = vmatprep.subr.bf16.mxu0 0
      %418 = vmatpush2.bf16.msra.mxu0 0
      %419 = vmatprep.subr.bf16.mxu0 0
      %420 = vmatpush2.bf16.msra.mxu0 0
      %421 = vmatprep.subr.bf16.mxu0 0
      %422 = vmatpush2.bf16.msra.mxu0 0
      %423 = vmatprep.subr.bf16.mxu0 0
      %424 = vmatpush2.bf16.msra.mxu0 0
      %425 = vmatprep.subr.bf16.mxu0 0
      %426 = vmatpush2.bf16.msra.mxu0 0
      %427 = vmatprep.mubr.bf16.mxu0 0
      %428 = vmatmul.mubr.bf16.gmra.mxu0 %v139
      %v429 = vpop.f32.mrf.mxu0
      %v430 = vadd.f32 %v185, %v429
      %v431 = vpop.f32.mrf.mxu0
      %v432 = vadd.f32 %v189, %v431
      %v433 = vpop.f32.mrf.mxu0
      %v434 = vpop.f32.mrf.mxu0
      %435 = vdwg.mxu0
      %v436 = vmax.f32 %v389, 0.0
      %v437 = vmax.f32 %v391, 0.0
      %v438 = vmax.f32 %v430, 0.0
      %v439 = vmax.f32 %v432, 0.0
      %v440 = vpack.c.bf16 %v436, %v436
      %v441 = vpack.c.bf16 %v437, %v437
      %v442 = vpack.c.bf16 %v438, %v438
      %v443 = vpack.c.bf16 %v439, %v439
      %v444 = vld [vmem:[%s3] sm:$0xf]
      %v445 = vld [vmem:[%s3 + $0x4] sm:$0xf]
      %v446 = vld [vmem:[%s3 + $0x8] sm:$0xf]
      %v447 = vld [vmem:[%s3 + $0xc] sm:$0xf]
      %v448 = vld [vmem:[%s3 + $0x10] sm:$0xf]
      %v449 = vld [vmem:[%s3 + $0x14] sm:$0xf]
      %v450 = vld [vmem:[%s3 + $0x18] sm:$0xf]
      %v451 = vld [vmem:[%s3 + $0x1c] sm:$0xf]
      %v452 = vld [vmem:[%s3 + $0x20] sm:$0xf]
      %v453 = vld [vmem:[%s3 + $0x24] sm:$0xf]
      %v454 = vld [vmem:[%s3 + $0x28] sm:$0xf]
      %v455 = vld [vmem:[%s3 + $0x2c] sm:$0xf]
      %v456 = vld [vmem:[%s3 + $0x30] sm:$0xf]
      %v457 = vld [vmem:[%s3 + $0x34] sm:$0xf]
      %v458 = vld [vmem:[%s3 + $0x38] sm:$0xf]
      %v459 = vld [vmem:[%s3 + $0x3c] sm:$0xf]
      %v460 = vld [vmem:[%s3 + $0x40] sm:$0xf]
      %v461 = vld [vmem:[%s3 + $0x44] sm:$0xf]
      %v462 = vld [vmem:[%s3 + $0x48] sm:$0xf]
      %v463 = vld [vmem:[%s3 + $0x4c] sm:$0xf]
      %v464 = vld [vmem:[%s3 + $0x50] sm:$0xf]
      %v465 = vld [vmem:[%s3 + $0x54] sm:$0xf]
      %v466 = vld [vmem:[%s3 + $0x58] sm:$0xf]
      %v467 = vld [vmem:[%s3 + $0x5c] sm:$0xf]
      %v468 = vld [vmem:[%s3 + $0x60] sm:$0xf]
      %v469 = vld [vmem:[%s3 + $0x64] sm:$0xf]
      %v470 = vld [vmem:[%s3 + $0x68] sm:$0xf]
      %v471 = vld [vmem:[%s3 + $0x6c] sm:$0xf]
      %v472 = vld [vmem:[%s3 + $0x70] sm:$0xf]
      %v473 = vld [vmem:[%s3 + $0x74] sm:$0xf]
      %v474 = vld [vmem:[%s3 + $0x78] sm:$0xf]
      %v475 = vld [vmem:[%s3 + $0x7c] sm:$0xf]
      %v476 = vld [vmem:[%s3 + $0x80] sm:$0xf]
      %v477 = vld [vmem:[%s3 + $0x84] sm:$0xf]
      %v478 = vld [vmem:[%s3 + $0x88] sm:$0xf]
      %v479 = vld [vmem:[%s3 + $0x8c] sm:$0xf]
      %v480 = vld [vmem:[%s3 + $0x90] sm:$0xf]
      %v481 = vld [vmem:[%s3 + $0x94] sm:$0xf]
      %v482 = vld [vmem:[%s3 + $0x98] sm:$0xf]
      %v483 = vld [vmem:[%s3 + $0x9c] sm:$0xf]
      %v484 = vld [vmem:[%s3 + $0xa0] sm:$0xf]
      %v485 = vld [vmem:[%s3 + $0xa4] sm:$0xf]
      %v486 = vld [vmem:[%s3 + $0xa8] sm:$0xf]
      %v487 = vld [vmem:[%s3 + $0xac] sm:$0xf]
      %v488 = vld [vmem:[%s3 + $0xb0] sm:$0xf]
      %v489 = vld [vmem:[%s3 + $0xb4] sm:$0xf]
      %v490 = vld [vmem:[%s3 + $0xb8] sm:$0xf]
      %v491 = vld [vmem:[%s3 + $0xbc] sm:$0xf]
      %v492 = vld [vmem:[%s3 + $0xc0] sm:$0xf]
      %v493 = vld [vmem:[%s3 + $0xc4] sm:$0xf]
      %v494 = vld [vmem:[%s3 + $0xc8] sm:$0xf]
      %v495 = vld [vmem:[%s3 + $0xcc] sm:$0xf]
      %v496 = vld [vmem:[%s3 + $0xd0] sm:$0xf]
      %v497 = vld [vmem:[%s3 + $0xd4] sm:$0xf]
      %v498 = vld [vmem:[%s3 + $0xd8] sm:$0xf]
      %v499 = vld [vmem:[%s3 + $0xdc] sm:$0xf]
      %v500 = vld [vmem:[%s3 + $0xe0] sm:$0xf]
      %v501 = vld [vmem:[%s3 + $0xe4] sm:$0xf]
      %v502 = vld [vmem:[%s3 + $0xe8] sm:$0xf]
      %v503 = vld [vmem:[%s3 + $0xec] sm:$0xf]
      %v504 = vld [vmem:[%s3 + $0xf0] sm:$0xf]
      %v505 = vld [vmem:[%s3 + $0xf4] sm:$0xf]
      %v506 = vld [vmem:[%s3 + $0xf8] sm:$0xf]
      %v507 = vld [vmem:[%s3 + $0xfc] sm:$0xf]
      %v508 = vld [vmem:[%s4] sm:$0x1]
      %v510 = vlaneseq
      %v511 = vshrl.u32 %v510, 7
      %v512 = vsub.s32 0, %v511
      %v513 = vrot.slane %v508, %v512
      %v579 = vunpack.c.l.b16 %v444
      %v580 = vunpack.c.l.b16 %v445
      %v581 = vunpack.c.l.b16 %v446
      %v582 = vunpack.c.l.b16 %v447
      %v583 = vunpack.c.l.b16 %v448
      %v584 = vunpack.c.l.b16 %v449
      %v585 = vunpack.c.l.b16 %v450
      %v586 = vunpack.c.l.b16 %v451
      %v587 = vunpack.c.l.b16 %v452
      %v588 = vunpack.c.l.b16 %v453
      %v589 = vunpack.c.l.b16 %v454
      %v590 = vunpack.c.l.b16 %v455
      %v591 = vunpack.c.l.b16 %v456
      %v592 = vunpack.c.l.b16 %v457
      %v593 = vunpack.c.l.b16 %v458
      %v594 = vunpack.c.l.b16 %v459
      %v595 = vunpack.c.l.b16 %v460
      %v596 = vunpack.c.l.b16 %v461
      %v597 = vunpack.c.l.b16 %v462
      %v598 = vunpack.c.l.b16 %v463
      %v599 = vunpack.c.l.b16 %v464
      %v600 = vunpack.c.l.b16 %v465
      %v601 = vunpack.c.l.b16 %v466
      %v602 = vunpack.c.l.b16 %v467
      %v603 = vunpack.c.l.b16 %v468
      %v604 = vunpack.c.l.b16 %v469
      %v605 = vunpack.c.l.b16 %v470
      %v606 = vunpack.c.l.b16 %v471
      %v607 = vunpack.c.l.b16 %v472
      %v608 = vunpack.c.l.b16 %v473
      %v609 = vunpack.c.l.b16 %v474
      %v610 = vunpack.c.l.b16 %v475
      %v611 = vunpack.c.l.b16 %v476
      %v612 = vunpack.c.l.b16 %v477
      %v613 = vunpack.c.l.b16 %v478
      %v614 = vunpack.c.l.b16 %v479
      %v615 = vunpack.c.l.b16 %v480
      %v616 = vunpack.c.l.b16 %v481
      %v617 = vunpack.c.l.b16 %v482
      %v618 = vunpack.c.l.b16 %v483
      %v619 = vunpack.c.l.b16 %v484
      %v620 = vunpack.c.l.b16 %v485
      %v621 = vunpack.c.l.b16 %v486
      %v622 = vunpack.c.l.b16 %v487
      %v623 = vunpack.c.l.b16 %v488
      %v624 = vunpack.c.l.b16 %v489
      %v625 = vunpack.c.l.b16 %v490
      %v626 = vunpack.c.l.b16 %v491
      %v627 = vunpack.c.l.b16 %v492
      %v628 = vunpack.c.l.b16 %v493
      %v629 = vunpack.c.l.b16 %v494
      %v630 = vunpack.c.l.b16 %v495
      %v631 = vunpack.c.l.b16 %v496
      %v632 = vunpack.c.l.b16 %v497
      %v633 = vunpack.c.l.b16 %v498
      %v634 = vunpack.c.l.b16 %v499
      %v635 = vunpack.c.l.b16 %v500
      %v636 = vunpack.c.l.b16 %v501
      %v637 = vunpack.c.l.b16 %v502
      %v638 = vunpack.c.l.b16 %v503
      %v639 = vunpack.c.l.b16 %v504
      %v640 = vunpack.c.l.b16 %v505
      %v641 = vunpack.c.l.b16 %v506
      %v642 = vunpack.c.l.b16 %v507
      %v643 = vpack.c.b16 %v580, %v579
      %v644 = vpack.c.b16 %v582, %v581
      %v645 = vpack.c.b16 %v584, %v583
      %v646 = vpack.c.b16 %v586, %v585
      %v647 = vpack.c.b16 %v588, %v587
      %v648 = vpack.c.b16 %v590, %v589
      %v649 = vpack.c.b16 %v592, %v591
      %v650 = vpack.c.b16 %v594, %v593
      %v651 = vpack.c.b16 %v596, %v595
      %v652 = vpack.c.b16 %v598, %v597
      %v653 = vpack.c.b16 %v600, %v599
      %v654 = vpack.c.b16 %v602, %v601
      %v655 = vpack.c.b16 %v604, %v603
      %v656 = vpack.c.b16 %v606, %v605
      %v657 = vpack.c.b16 %v608, %v607
      %v658 = vpack.c.b16 %v610, %v609
      %v659 = vpack.c.b16 %v612, %v611
      %v660 = vpack.c.b16 %v614, %v613
      %v661 = vpack.c.b16 %v616, %v615
      %v662 = vpack.c.b16 %v618, %v617
      %v663 = vpack.c.b16 %v620, %v619
      %v664 = vpack.c.b16 %v622, %v621
      %v665 = vpack.c.b16 %v624, %v623
      %v666 = vpack.c.b16 %v626, %v625
      %v667 = vpack.c.b16 %v628, %v627
      %v668 = vpack.c.b16 %v630, %v629
      %v669 = vpack.c.b16 %v632, %v631
      %v670 = vpack.c.b16 %v634, %v633
      %v671 = vpack.c.b16 %v636, %v635
      %v672 = vpack.c.b16 %v638, %v637
      %v673 = vpack.c.b16 %v640, %v639
      %v674 = vpack.c.b16 %v642, %v641
      %707 = vmatprep.subr.bf16.mxu0 0
      %708 = vmatpush1.bf16.msra.mxu0 %v650
      %709 = vmatprep.subr.bf16.mxu0 0
      %710 = vmatpush1.bf16.msra.mxu0 %v649
      %711 = vmatprep.subr.bf16.mxu0 0
      %712 = vmatpush1.bf16.msra.mxu0 %v648
      %713 = vmatprep.subr.bf16.mxu0 0
      %714 = vmatpush1.bf16.msra.mxu0 %v647
      %715 = vmatprep.subr.bf16.mxu0 0
      %716 = vmatpush1.bf16.msra.mxu0 %v646
      %717 = vmatprep.subr.bf16.mxu0 0
      %718 = vmatpush1.bf16.msra.mxu0 %v645
      %719 = vmatprep.subr.bf16.mxu0 0
      %720 = vmatpush1.bf16.msra.mxu0 %v644
      %721 = vmatprep.subr.bf16.mxu0 0
      %722 = vmatpush1.bf16.msra.mxu0 %v643
      %723 = vmatprep.subr.bf16.mxu0 0
      %724 = vmatpush2.bf16.msra.mxu0 %v658
      %725 = vmatprep.subr.bf16.mxu0 0
      %726 = vmatpush2.bf16.msra.mxu0 %v657
      %727 = vmatprep.subr.bf16.mxu0 0
      %728 = vmatpush2.bf16.msra.mxu0 %v656
      %729 = vmatprep.subr.bf16.mxu0 0
      %730 = vmatpush2.bf16.msra.mxu0 %v655
      %731 = vmatprep.subr.bf16.mxu0 0
      %732 = vmatpush2.bf16.msra.mxu0 %v654
      %733 = vmatprep.subr.bf16.mxu0 0
      %734 = vmatpush2.bf16.msra.mxu0 %v653
      %735 = vmatprep.subr.bf16.mxu0 0
      %736 = vmatpush2.bf16.msra.mxu0 %v652
      %737 = vmatprep.subr.bf16.mxu0 0
      %738 = vmatpush2.bf16.msra.mxu0 %v651
      %739 = vmatprep.mubr.bf16.mxu0 %v441
      %740 = vmatmul.mubr.bf16.gmra.mxu0 %v440
      %v741 = vpop.f32.mrf.mxu0
      %v742 = vadd.f32 %v513, %v741
      %v743 = vpop.f32.mrf.mxu0
      %v744 = vpop.f32.mrf.mxu0
      %v745 = vpop.f32.mrf.mxu0
      %746 = vdwg.mxu0
      %747 = vmatprep.subr.bf16.mxu0 0
      %748 = vmatpush1.bf16.msra.mxu0 %v666
      %749 = vmatprep.subr.bf16.mxu0 0
      %750 = vmatpush1.bf16.msra.mxu0 %v665
      %751 = vmatprep.subr.bf16.mxu0 0
      %752 = vmatpush1.bf16.msra.mxu0 %v664
      %753 = vmatprep.subr.bf16.mxu0 0
      %754 = vmatpush1.bf16.msra.mxu0 %v663
      %755 = vmatprep.subr.bf16.mxu0 0
      %756 = vmatpush1.bf16.msra.mxu0 %v662
      %757 = vmatprep.subr.bf16.mxu0 0
      %758 = vmatpush1.bf16.msra.mxu0 %v661
      %759 = vmatprep.subr.bf16.mxu0 0
      %760 = vmatpush1.bf16.msra.mxu0 %v660
      %761 = vmatprep.subr.bf16.mxu0 0
      %762 = vmatpush1.bf16.msra.mxu0 %v659
      %763 = vmatprep.subr.bf16.mxu0 0
      %764 = vmatpush2.bf16.msra.mxu0 %v674
      %765 = vmatprep.subr.bf16.mxu0 0
      %766 = vmatpush2.bf16.msra.mxu0 %v673
      %767 = vmatprep.subr.bf16.mxu0 0
      %768 = vmatpush2.bf16.msra.mxu0 %v672
      %769 = vmatprep.subr.bf16.mxu0 0
      %770 = vmatpush2.bf16.msra.mxu0 %v671
      %771 = vmatprep.subr.bf16.mxu0 0
      %772 = vmatpush2.bf16.msra.mxu0 %v670
      %773 = vmatprep.subr.bf16.mxu0 0
      %774 = vmatpush2.bf16.msra.mxu0 %v669
      %775 = vmatprep.subr.bf16.mxu0 0
      %776 = vmatpush2.bf16.msra.mxu0 %v668
      %777 = vmatprep.subr.bf16.mxu0 0
      %778 = vmatpush2.bf16.msra.mxu0 %v667
      %779 = vmatprep.mubr.bf16.mxu0 %v443
      %780 = vmatmul.mubr.bf16.gmra.mxu0 %v442
      %v781 = vpop.f32.mrf.mxu0
      %v782 = vadd.f32 %v742, %v781
      %v783 = vpop.f32.mrf.mxu0
      %v784 = vpop.f32.mrf.mxu0
      %v785 = vpop.f32.mrf.mxu0
      %786 = vdwg.mxu0
      %787 = vst [vmem:[#allocation3] sm:$0x3] %v782
    $region29: #{birdclef_forward.1} parent=1 // pred_fallthru
      _
    // Predicated region
    $region30: #{birdclef_forward.1} parent=1 // pred_check
      _
    $region31: #{birdclef_forward.1} parent=1 // pred_check_branch
      %789 = sbr.rel (0) target = $region33
    $region32: #{birdclef_forward.1} parent=1 // pred_region
      %s791 = ssub.s32 32, 32
      %792 = vsyncadd [#allocation4], %s791
      %s794 = sshll.u32 [#allocation3], 4
      %s795 = int_to_ptr.vmem [resolvable:$true] %s794
      %797 = dma.vmem_to_hbm [thread:$0]  %s795, 32, %s5, [#allocation4]
    $region33: #{birdclef_forward.1} parent=1 // pred_fallthru
      _
    // Predicated region
    $region34: #{birdclef_forward.1} parent=1 // pred_check
      _
    $region35: #{birdclef_forward.1} parent=1 // pred_check_branch
      %799 = sbr.rel (0) target = $region37
    $region36: #{birdclef_forward.1} parent=1 // pred_region
      %800 = dma.done [#allocation4], 32
    $region37: #{birdclef_forward.1} parent=1 // pred_fallthru
      _
    %801 = vsyncpa [#allocation4], 1

</llo_original>
